<compile_context>
chip_gen: v7x
topology: tpu7x:2x2x1
jax: 0.10.0
libtpu: 0.0.40
codegen_flags: <defaults>
</compile_context>

<pallas_src>
import functools

import numpy as np

import jax
import jax.numpy as jnp
from jax.experimental import pallas as pl
from jax.experimental.pallas import tpu as pltpu


def _pixel_shuffle_kernel(x_ref, s_ref, o_ref, *, r: int, oc_blk: int):
    # x_ref: (1, oc_blk*r*r, H, W)
    # s_ref: (r*r*W, r*r*W)  one-hot lane-permutation matrix (grid-invariant)
    # o_ref: (1, oc_blk, H, r*r*W)
    H = x_ref.shape[2]
    W = x_ref.shape[3]
    rr = r * r

    # Build X: (oc_blk*H, rr*W) with X[c*H + h, q*W + w] = x[c*rr + q, h, w].
    # Sublane concat over channels (cheap, H multiple of 8 in typical use) and
    # lane concat over the r*r sub-planes.
    cols = []
    for q in range(rr):
        rows = [x_ref[0, c * rr + q, :, :] for c in range(oc_blk)]
        cols.append(rows[0] if oc_blk == 1 else jnp.concatenate(rows, axis=0))
    x_cat = cols[0] if rr == 1 else jnp.concatenate(cols, axis=1)

    # Pure lane permutation done as a single one-hot matmul (exact at HIGHEST:
    # every output element is x * 1.0 plus exact zeros).
    y = jnp.dot(
        x_cat.astype(jnp.float32),
        s_ref[...],
        preferred_element_type=jnp.float32,
        precision=jax.lax.Precision.HIGHEST,
    )

    # y[c*H + h, i*(W*r) + w*r + j] is exactly the output plane for channel c in
    # the (H, r*r*W) layout; store per channel with plain (static) slices.
    for c in range(oc_blk):
        o_ref[0, c, :, :] = y[c * H:(c + 1) * H, :].astype(o_ref.dtype)


def _pick_oc_block(oc, rr, H, W, itemsize, budget_bytes=8 * 1024 * 1024):
    # Per output channel and grid step (double-buffered in + out blocks plus the
    # f32 concat / matmul intermediates).
    per_oc = rr * H * W * (4 * itemsize + 8)
    best = 1
    for d in range(1, oc + 1):
        if oc % d == 0 and d * per_oc <= budget_bytes:
            best = d
    return best


def _permutation_matrix(r, W):
    # S[q*W + w, i*(W*r) + w*r + j] = 1,  q = i*r + j.
    rr = r * r
    k = np.arange(rr * W)
    q, w = k // W, k % W
    i, j = q // r, q % r
    dest = i * (W * r) + w * r + j
    s = np.zeros((rr * W, rr * W), dtype=np.float32)
    s[k, dest] = 1.0
    return jnp.asarray(s)


def pixel_shuffle_pallas(x, scale_factor):
    """Pallas equivalent of pixel_shuffle(x, scale_factor) for scale_factor >= 1."""
    if scale_factor < 1:
        # TODO(synk): scale_factor < 1 (pixel unshuffle / space-to-depth) branch not
        # implemented in the Pallas kernel; only the upscale path is exercised here.
        raise NotImplementedError("scale_factor < 1 not implemented")
    r = int(scale_factor)
    assert r == scale_factor, "only integer scale factors supported"

    B, C, H, W = x.shape
    rr = r * r
    assert C % rr == 0
    oc = C // rr

    if r == 1:
        return x  # identity permutation

    oc_blk = _pick_oc_block(oc, rr, H, W, x.dtype.itemsize)
    n_blk = oc // oc_blk
    s_mat = _permutation_matrix(r, W)

    kernel = functools.partial(_pixel_shuffle_kernel, r=r, oc_blk=oc_blk)
    out = pl.pallas_call(
        kernel,
        # (B, oc, H, r*r*W) is bit-identical contiguous memory to
        # (B, oc, H*r, W*r); reshaped for free below.
        out_shape=jax.ShapeDtypeStruct((B, oc, H, rr * W), x.dtype),
        grid=(B, n_blk),
        in_specs=[
            pl.BlockSpec((1, oc_blk * rr, H, W), lambda b, c: (b, c, 0, 0)),
            # Grid-invariant permutation matrix: fetched once, reused each step.
            pl.BlockSpec((rr * W, rr * W), lambda b, c: (0, 0)),
        ],
        out_specs=pl.BlockSpec((1, oc_blk, H, rr * W), lambda b, c: (b, c, 0, 0)),
        compiler_params=pltpu.CompilerParams(
            dimension_semantics=("parallel", "parallel"),
            vmem_limit_bytes=32 * 1024 * 1024,
        ),
    )(x, s_mat)

    return out.reshape(B, oc, H * r, W * r)


class PixelShuffleD:
    """JAX/Pallas mirror of the PyTorch PixelShuffleD module (no parameters)."""

    def __init__(self, scale_factor):
        self.scale_factor = scale_factor

    def __call__(self, x):
        return pixel_shuffle_pallas(x, self.scale_factor)


def pixel_shuffle_ref(x, r):
    """Pure-JAX reference matching the PyTorch view/permute semantics (r >= 1)."""
    B, C, H, W = x.shape
    oc = C // (r * r)
    xv = x.reshape(B, oc, r, r, H, W)
    y = jnp.transpose(xv, (0, 1, 4, 2, 5, 3))
    return y.reshape(B, oc, H * r, W * r)


if __name__ == "__main__":
    key = jax.random.PRNGKey(0)
    B, C, H, W = 2, 8, 16, 16
    r = 2
    x = jax.random.normal(key, (B, C, H, W), dtype=jnp.float32)

    module = PixelShuffleD(scale_factor=r)
    out = jax.block_until_ready(module(x))

    ref = pixel_shuffle_ref(x, r)
    assert out.shape == (B, C // (r * r), H * r, W * r), out.shape
    assert out.dtype == x.dtype
    assert jnp.allclose(out, ref, atol=0.0, rtol=0.0), "mismatch vs reference"

    print("KERNEL_OK")
</pallas_src>

<mosaic_0001>
module attributes {stable_mosaic.version = 11 : i64} {
  func.func @_pixel_shuffle_kernel(%arg0: i32, %arg1: i32, %arg2: memref<1x8x16x16xf32, #tpu.memory_space<vmem>>, %arg3: memref<64x64xf32, #tpu.memory_space<vmem>>, %arg4: memref<1x2x16x64xf32, #tpu.memory_space<vmem>>) attributes {dimension_semantics = [#tpu.dimension_semantics<parallel>, #tpu.dimension_semantics<parallel>], iteration_bounds = array<i64: 2, 1>, scalar_prefetch = 0 : i64, scratch_operands = 0 : i64, tpu.core_type = #tpu.core_type<tc>, window_params = [{transform_indices = @transform_0, window_bounds = array<i64: 1, 8, 16, 16>}, {pipeline_mode = #tpu.pipeline_mode<synchronous>, transform_indices = @transform_1, window_bounds = array<i64: 64, 64>}, {transform_indices = @transform_2, window_bounds = array<i64: 1, 2, 16, 64>}]} {
    %c0 = arith.constant 0 : index
    %c0_0 = arith.constant 0 : index
    %c0_1 = arith.constant 0 : index
    %c0_2 = arith.constant 0 : index
    %0 = vector.load %arg2[%c0, %c0_0, %c0_1, %c0_2] : memref<1x8x16x16xf32, #tpu.memory_space<vmem>>, vector<1x1x16x16xf32>
    %1 = vector.shape_cast %0 : vector<1x1x16x16xf32> to vector<16x16xf32>
    %c0_3 = arith.constant 0 : index
    %c4 = arith.constant 4 : index
    %c0_4 = arith.constant 0 : index
    %c0_5 = arith.constant 0 : index
    %2 = vector.load %arg2[%c0_3, %c4, %c0_4, %c0_5] : memref<1x8x16x16xf32, #tpu.memory_space<vmem>>, vector<1x1x16x16xf32>
    %3 = vector.shape_cast %2 : vector<1x1x16x16xf32> to vector<16x16xf32>
    %4 = tpu.concatenate %1, %3 in 0 : vector<16x16xf32>, vector<16x16xf32> -> vector<32x16xf32>
    %c0_6 = arith.constant 0 : index
    %c1 = arith.constant 1 : index
    %c0_7 = arith.constant 0 : index
    %c0_8 = arith.constant 0 : index
    %5 = vector.load %arg2[%c0_6, %c1, %c0_7, %c0_8] : memref<1x8x16x16xf32, #tpu.memory_space<vmem>>, vector<1x1x16x16xf32>
    %6 = vector.shape_cast %5 : vector<1x1x16x16xf32> to vector<16x16xf32>
    %c0_9 = arith.constant 0 : index
    %c5 = arith.constant 5 : index
    %c0_10 = arith.constant 0 : index
    %c0_11 = arith.constant 0 : index
    %7 = vector.load %arg2[%c0_9, %c5, %c0_10, %c0_11] : memref<1x8x16x16xf32, #tpu.memory_space<vmem>>, vector<1x1x16x16xf32>
    %8 = vector.shape_cast %7 : vector<1x1x16x16xf32> to vector<16x16xf32>
    %9 = tpu.concatenate %6, %8 in 0 : vector<16x16xf32>, vector<16x16xf32> -> vector<32x16xf32>
    %c0_12 = arith.constant 0 : index
    %c2 = arith.constant 2 : index
    %c0_13 = arith.constant 0 : index
    %c0_14 = arith.constant 0 : index
    %10 = vector.load %arg2[%c0_12, %c2, %c0_13, %c0_14] : memref<1x8x16x16xf32, #tpu.memory_space<vmem>>, vector<1x1x16x16xf32>
    %11 = vector.shape_cast %10 : vector<1x1x16x16xf32> to vector<16x16xf32>
    %c0_15 = arith.constant 0 : index
    %c6 = arith.constant 6 : index
    %c0_16 = arith.constant 0 : index
    %c0_17 = arith.constant 0 : index
    %12 = vector.load %arg2[%c0_15, %c6, %c0_16, %c0_17] : memref<1x8x16x16xf32, #tpu.memory_space<vmem>>, vector<1x1x16x16xf32>
    %13 = vector.shape_cast %12 : vector<1x1x16x16xf32> to vector<16x16xf32>
    %14 = tpu.concatenate %11, %13 in 0 : vector<16x16xf32>, vector<16x16xf32> -> vector<32x16xf32>
    %c0_18 = arith.constant 0 : index
    %c3 = arith.constant 3 : index
    %c0_19 = arith.constant 0 : index
    %c0_20 = arith.constant 0 : index
    %15 = vector.load %arg2[%c0_18, %c3, %c0_19, %c0_20] : memref<1x8x16x16xf32, #tpu.memory_space<vmem>>, vector<1x1x16x16xf32>
    %16 = vector.shape_cast %15 : vector<1x1x16x16xf32> to vector<16x16xf32>
    %c0_21 = arith.constant 0 : index
    %c7 = arith.constant 7 : index
    %c0_22 = arith.constant 0 : index
    %c0_23 = arith.constant 0 : index
    %17 = vector.load %arg2[%c0_21, %c7, %c0_22, %c0_23] : memref<1x8x16x16xf32, #tpu.memory_space<vmem>>, vector<1x1x16x16xf32>
    %18 = vector.shape_cast %17 : vector<1x1x16x16xf32> to vector<16x16xf32>
    %19 = tpu.concatenate %16, %18 in 0 : vector<16x16xf32>, vector<16x16xf32> -> vector<32x16xf32>
    %20 = tpu.concatenate %4, %9, %14, %19 in 1 : vector<32x16xf32>, vector<32x16xf32>, vector<32x16xf32>, vector<32x16xf32> -> vector<32x64xf32>
    %c0_24 = arith.constant 0 : index
    %c0_25 = arith.constant 0 : index
    %21 = vector.load %arg3[%c0_24, %c0_25] : memref<64x64xf32, #tpu.memory_space<vmem>>, vector<64x64xf32>
    %cst = arith.constant dense<0.000000e+00> : vector<32x64xf32>
    %22 = tpu.matmul %20, %21, %cst {dimension_numbers = #tpu.dot_dimension_numbers<[1], [0], [0], [1], [0, 0, 1, 1], [], []>, precision = #tpu.contract_precision<fp32>} : vector<32x64xf32>, vector<64x64xf32>, vector<32x64xf32> -> vector<32x64xf32>
    %23 = vector.extract_strided_slice %22 {offsets = [0, 0], sizes = [16, 64], strides = [1, 1]} : vector<32x64xf32> to vector<16x64xf32>
    %c0_26 = arith.constant 0 : index
    %c0_27 = arith.constant 0 : index
    %c0_28 = arith.constant 0 : index
    %c0_29 = arith.constant 0 : index
    %24 = vector.load %arg4[%c0_26, %c0_27, %c0_28, %c0_29] : memref<1x2x16x64xf32, #tpu.memory_space<vmem>>, vector<1x1x16x64xf32>
    %25 = vector.shape_cast %24 : vector<1x1x16x64xf32> to vector<16x64xf32>
    %26 = vector.shape_cast %23 : vector<16x64xf32> to vector<1x1x16x64xf32>
    tpu.vector_store %arg4[%c0_26, %c0_27, %c0_28, %c0_29], %26 {strides = array<i32>} : memref<1x2x16x64xf32, #tpu.memory_space<vmem>>, vector<1x1x16x64xf32>,
    %27 = vector.extract_strided_slice %22 {offsets = [16, 0], sizes = [16, 64], strides = [1, 1]} : vector<32x64xf32> to vector<16x64xf32>
    %c0_30 = arith.constant 0 : index
    %c1_31 = arith.constant 1 : index
    %c0_32 = arith.constant 0 : index
    %c0_33 = arith.constant 0 : index
    %28 = vector.load %arg4[%c0_30, %c1_31, %c0_32, %c0_33] : memref<1x2x16x64xf32, #tpu.memory_space<vmem>>, vector<1x1x16x64xf32>
    %29 = vector.shape_cast %28 : vector<1x1x16x64xf32> to vector<16x64xf32>
    %30 = vector.shape_cast %27 : vector<16x64xf32> to vector<1x1x16x64xf32>
    tpu.vector_store %arg4[%c0_30, %c1_31, %c0_32, %c0_33], %30 {strides = array<i32>} : memref<1x2x16x64xf32, #tpu.memory_space<vmem>>, vector<1x1x16x64xf32>,
    return
  }
  func.func @transform_0(%arg0: i32, %arg1: i32) -> (i32, i32, i32, i32) {
    %c0_i32 = arith.constant 0 : i32
    %c0_i32_0 = arith.constant 0 : i32
    %c0_i32_1 = arith.constant 0 : i32
    return %arg0, %arg1, %c0_i32, %c0_i32_0 : i32, i32, i32, i32
  }
  func.func @transform_1(%arg0: i32, %arg1: i32) -> (i32, i32) {
    %c0_i32 = arith.constant 0 : i32
    %c0_i32_0 = arith.constant 0 : i32
    %c0_i32_1 = arith.constant 0 : i32
    return %c0_i32, %c0_i32_0 : i32, i32
  }
  func.func @transform_2(%arg0: i32, %arg1: i32) -> (i32, i32, i32, i32) {
    %c0_i32 = arith.constant 0 : i32
    %c0_i32_0 = arith.constant 0 : i32
    %c0_i32_1 = arith.constant 0 : i32
    return %arg0, %arg1, %c0_i32, %c0_i32_0 : i32, i32, i32, i32
  }
}

</mosaic_0001>

<llo_original>
// kernel: tpu_custom_call.1
$region0: #{tpu_custom_call.1}
  #allocation0 [shape = 'u32[]', space=smem, size = 0x4, offset = 0x4, fixed_abs, tag = 'smem constant byte address 0x4 - core index']
  #allocation1 [shape = 'u32[144,128]{1,0:T(1,128)}', space=vmem, size = 0x12000, scoped, tag = 'internal scratch']
  %s0 = inlined_call_operand.hbm [shape: f32[2,8,16,16], index: 0, kind: input, shape index: {}]
  %s1 = inlined_call_operand.hbm [shape: f32[64,64], index: 1, kind: input, shape index: {}]
  %s2 = inlined_call_operand.hbm [shape: f32[2,2,16,64], index: 2, kind: output, shape index: {}]
  %s3 = sld [smem:[#allocation0]]
  $region49: #{tpu_custom_call.1} parent=0
    _
  %s5 = ssub.s32 1, %s3
  %s6 = scalar_select 0, %s5, %s3
  $region1: #{tpu_custom_call.1} parent=0
    #allocation2 [shape = 'u8[131072]{0}', space=vmem, size = 0x20000, scoped, tag = 'input window, operand 0']
    #allocation3 [shape = 's32[2]{0}', space=sflag, size = 0x8, scoped, tag = 'scoped memory for tpu_custom_call.1']
    #allocation4 [shape = 's32[2]{0}', space=sflag, size = 0x8, scoped, tag = 'scoped memory for tpu_custom_call.1']
    #allocation5 [shape = 'u8[32768]{0}', space=vmem, size = 0x8000, scoped, tag = 'input window, operand 1, single buffered']
    #allocation6 [shape = 's32[1]{0}', space=sflag, size = 0x4, scoped, tag = 'scoped memory for tpu_custom_call.1']
    #allocation7 [shape = 'u8[32768]{0}', space=vmem, size = 0x8000, scoped, tag = 'output window, operand 0']
    %7 = vsyncpa [#allocation3], 0
    %s8 = scalar_lea.sflag [#allocation3], 1
    %9 = vsyncpa %s8, 0
    %10 = vsyncpa [#allocation6], 0
    %11 = vsyncpa [#allocation4], 0
    %s12 = scalar_lea.sflag [#allocation4], 1
    %13 = vsyncpa %s12, 0
    loop: start=0, step=1, limit=4
    $region2: #{tpu_custom_call.1} parent=1 // loop_pre_header
      _
    $region3: #{tpu_custom_call.1} parent=1 // loop_header
      %s15 = sphi 0, %s19
      %p16 = scmp.ge.s32.totalorder %s15, 4
      %s22 = sphi 0, %s34
      %s23 = sphi 0, %s30
      %s24 = sphi 0, %s22
      %s25 = sphi 0, %s23
      %s26 = sphi 0, %s24
      %s27 = sphi 0, %s25
      %s39 = sphi 0, %s41
      %s42 = sphi 0, %s39
      %s43 = sphi 0, %s42
      %s59 = sphi 0, %s43
      %s63 = sphi 0, %s63
      %s65 = sphi 0, %s63
      %s66 = sphi 0, %s65
      %s80 = sphi 0, %s66
      %s88 = sphi 0, %s90
      %s91 = sphi 0, %s88
      %s92 = sphi 0, %s91
      %s108 = sphi 0, %s92
    $region4: #{tpu_custom_call.1} parent=1 // loop_header_branch
      %18 = sbr.rel (%p16) target = $region8
    $region5: #{tpu_custom_call.1} parent=1 // loop_body
      %s20 = ssub.s32 %s15, 1
      %s21 = ssub.s32 %s15, 2
      %s28 = sadd.s32 1, %s23
      %p29 = scmp.ge.s32.totalorder %s28, 1
      %s30 = scalar_select %p29, 0, %s28
      %s31 = sadd.s32 1, %s22
      %s32 = scalar_select %p29, %s31, %s22
      %p33 = scmp.ge.s32.totalorder %s32, 2
      %s34 = scalar_select %p33, 0, %s32
      %s35 = ssub.s32 %s22, %s34
      %s36 = ssub.s32 %s23, %s30
      %s37 = sor.u32 %s35, %s36
      %p38 = scmp.eq.s32.totalorder %s37, 0
      %s40 = sadd.s32 %s39, 1
      %s41 = scalar_select %p38, %s39, %s40
      %p44 = pneg %p38
      %p45 = scmp.eq.s32.totalorder %s15, 1
      %p46 = por %p44, %p45
      %p47 = scmp.ne.s32.totalorder %s39, %s42
      %p48 = scmp.eq.s32.totalorder %s15, 0
      %p49 = por %p47, %p48
      %p50 = scmp.ne.s32.totalorder %s39, %s42
      %p51 = scmp.eq.s32.totalorder %s20, 1
      %p52 = por %p50, %p51
      %p53 = scmp.ne.s32.totalorder %s42, %s43
      %p54 = scmp.eq.s32.totalorder %s20, 0
      %p55 = por %p53, %p54
      %p56 = scmp.ne.s32.totalorder %s42, %s43
      %p57 = scmp.eq.s32.totalorder %s21, 1
      %p58 = por %p56, %p57
      %p60 = scmp.ne.s32.totalorder %s43, %s59
      %p61 = scmp.eq.s32.totalorder %s21, 0
      %p62 = por %p60, %p61
      %s64 = sadd.s32 %s63, 1
      %p67 = scmp.eq.s32.totalorder %s15, 1
      %p68 = scmp.ne.s32.totalorder %s63, %s65
      %p69 = scmp.eq.s32.totalorder %s15, 0
      %p70 = por %p68, %p69
      %p71 = scmp.ne.s32.totalorder %s63, %s65
      %p72 = scmp.eq.s32.totalorder %s20, 1
      %p73 = por %p71, %p72
      %p74 = scmp.ne.s32.totalorder %s65, %s66
      %p75 = scmp.eq.s32.totalorder %s20, 0
      %p76 = por %p74, %p75
      %p77 = scmp.ne.s32.totalorder %s65, %s66
      %p78 = scmp.eq.s32.totalorder %s21, 1
      %p79 = por %p77, %p78
      %p81 = scmp.ne.s32.totalorder %s66, %s80
      %p82 = scmp.eq.s32.totalorder %s21, 0
      %p83 = por %p81, %p82
      %s84 = ssub.s32 %s22, %s34
      %s85 = ssub.s32 %s23, %s30
      %s86 = sor.u32 %s84, %s85
      %p87 = scmp.eq.s32.totalorder %s86, 0
      %s89 = sadd.s32 %s88, 1
      %s90 = scalar_select %p87, %s88, %s89
      %p93 = pneg %p87
      %p94 = scmp.eq.s32.totalorder %s15, 1
      %p95 = por %p93, %p94
      %p96 = scmp.ne.s32.totalorder %s88, %s91
      %p97 = scmp.eq.s32.totalorder %s15, 0
      %p98 = por %p96, %p97
      %p99 = scmp.ne.s32.totalorder %s88, %s91
      %p100 = scmp.eq.s32.totalorder %s20, 1
      %p101 = por %p99, %p100
      %p102 = scmp.ne.s32.totalorder %s91, %s92
      %p103 = scmp.eq.s32.totalorder %s20, 0
      %p104 = por %p102, %p103
      %p105 = scmp.ne.s32.totalorder %s91, %s92
      %p106 = scmp.eq.s32.totalorder %s21, 1
      %p107 = por %p105, %p106
      %p109 = scmp.ne.s32.totalorder %s92, %s108
      %p110 = scmp.eq.s32.totalorder %s21, 0
      %p111 = por %p109, %p110
      %p112 = scmp.le.s32.totalorder 1, %s15
      %p113 = scmp.lt.s32.totalorder %s15, 3
      %p114 = pnand %p112, %p113
      %p115 = pneg %p114
      // Predicated region
      $region9: #{tpu_custom_call.1} parent=5 // pred_check
        _
      $region10: #{tpu_custom_call.1} parent=5 // pred_check_branch
        %117 = sbr.rel (%p114) target = $region12
      $region11: #{tpu_custom_call.1} parent=5 // pred_region
        %s118 = ssub.s32 %s15, 1
        // Predicated region
        $region13: #{tpu_custom_call.1} parent=11 // pred_check
          %p119 = pneg %p76
        $region14: #{tpu_custom_call.1} parent=11 // pred_check_branch
          %121 = sbr.rel (%p119) target = $region16
        $region15: #{tpu_custom_call.1} parent=11 // pred_region
          %s123 = ssub.s32 1024, 1024
          %124 = vsyncadd [#allocation6], %s123
          %s125 = sshll.u32 [#allocation5], 4
          %s126 = int_to_ptr.vmem [resolvable:$true] %s125
          %131 = dma.hbm_to_vmem [thread:$0]  %s1, 1024, %s126, [#allocation6], 128, 128, 8
        $region16: #{tpu_custom_call.1} parent=11 // pred_fallthru
          _
      $region12: #{tpu_custom_call.1} parent=5 // pred_fallthru
        _
      %p132 = scmp.lt.s32.totalorder %s15, 2
      // Predicated region
      $region17: #{tpu_custom_call.1} parent=5 // pred_check
        %p133 = pneg %p132
      $region18: #{tpu_custom_call.1} parent=5 // pred_check_branch
        %135 = sbr.rel (%p133) target = $region20
      $region19: #{tpu_custom_call.1} parent=5 // pred_region
        // Predicated region
        $region21: #{tpu_custom_call.1} parent=19 // pred_check
          %p136 = pneg %p49
        $region22: #{tpu_custom_call.1} parent=19 // pred_check_branch
          %138 = sbr.rel (%p136) target = $region24
        $region23: #{tpu_custom_call.1} parent=19 // pred_region
          %s139 = sand.u32 %s39, 1
          %s140 = scalar_lea.sflag [#allocation3], %s139
          %s141 = sand.u32 %s39, 1
          %s142 = smul.addr %s141, 128
          %s143 = scalar_lea.vmem [#allocation2], %s142
          %s144 = smul.u32 8, %s23
          %s146 = ssub.s32 2048, 2048
          %147 = vsyncadd %s140, %s146
          %s148 = smul.addr %s144, 2
          %s149 = smul.addr %s22, 16
          %s150 = sadd.s32 %s148, %s149
          %s151 = smul.addr %s150, 128
          %s152 = scalar_lea.hbm %s0, %s151
          %s153 = sshll.u32 %s143, 4
          %s154 = int_to_ptr.vmem [resolvable:$true] %s153
          %159 = dma.hbm_to_vmem [thread:$0]  %s152, 2048, %s154, %s140, 128, 128, 8
        $region24: #{tpu_custom_call.1} parent=19 // pred_fallthru
          _
      $region20: #{tpu_custom_call.1} parent=5 // pred_fallthru
        _
      %p160 = scmp.le.s32.totalorder 1, %s15
      %p161 = scmp.lt.s32.totalorder %s15, 3
      %p162 = pnand %p160, %p161
      %p163 = pneg %p162
      // Predicated region
      $region25: #{tpu_custom_call.1} parent=5 // pred_check
        _
      $region26: #{tpu_custom_call.1} parent=5 // pred_check_branch
        %165 = sbr.rel (%p162) target = $region28
      $region27: #{tpu_custom_call.1} parent=5 // pred_region
        %s166 = ssub.s32 %s15, 1
        %s167 = sand.u32 %s42, 1
        %s168 = scalar_lea.sflag [#allocation3], %s167
        %s169 = sand.u32 %s42, 1
        %s170 = smul.addr %s169, 128
        %s171 = scalar_lea.vmem [#allocation2], %s170
        // Predicated region
        $region29: #{tpu_custom_call.1} parent=27 // pred_check
          %p172 = pneg %p55
        $region30: #{tpu_custom_call.1} parent=27 // pred_check_branch
          %174 = sbr.rel (%p172) target = $region32
        $region31: #{tpu_custom_call.1} parent=27 // pred_region
          %175 = dma.done %s168, 2048
        $region32: #{tpu_custom_call.1} parent=27 // pred_fallthru
          _
        // Predicated region
        $region33: #{tpu_custom_call.1} parent=27 // pred_check
          %p176 = pneg %p76
        $region34: #{tpu_custom_call.1} parent=27 // pred_check_branch
          %178 = sbr.rel (%p176) target = $region36
        $region35: #{tpu_custom_call.1} parent=27 // pred_region
          %179 = dma.done [#allocation6], 1024
        $region36: #{tpu_custom_call.1} parent=27 // pred_fallthru
          _
        %s180 = sand.u32 %s42, 1
        %s181 = scalar_lea.sflag [#allocation3], %s180
        %s182 = sand.u32 %s42, 1
        %s183 = smul.addr %s182, 128
        %s184 = scalar_lea.vmem [#allocation2], %s183
        %p185 = pneg %p55
        %p186 = pneg %p52
        %p187 = pneg %p76
        %p188 = pneg %p73
        %p189 = pneg %p104
        %p190 = pneg %p101
        %s191 = sand.u32 %s91, 1
        %s192 = scalar_lea.sflag [#allocation4], %s191
        %s193 = sand.u32 %s91, 1
        %s194 = smul.addr %s193, 32
        %s195 = scalar_lea.vmem [#allocation7], %s194
        %s196 = smul.u32 8, %s25
        %s197 = smul.u32 2, %s25
        %v198 = vld [vmem:[%s171] sm:$0xff]
        %v199 = vld [vmem:[%s171 + $0x8] sm:$0xff]
        %s200 = scalar_lea.vmem %s171, 64 [#allocation2]
        %v201 = vld [vmem:[%s200] sm:$0xff]
        %v202 = vld [vmem:[%s200 + $0x8] sm:$0xff]
        %s203 = scalar_lea.vmem %s171, 16 [#allocation2]
        %v204 = vld [vmem:[%s203] sm:$0xff]
        %v205 = vld [vmem:[%s203 + $0x8] sm:$0xff]
        %s206 = scalar_lea.vmem %s171, 80 [#allocation2]
        %v207 = vld [vmem:[%s206] sm:$0xff]
        %v208 = vld [vmem:[%s206 + $0x8] sm:$0xff]
        %s209 = scalar_lea.vmem %s171, 32 [#allocation2]
        %v210 = vld [vmem:[%s209] sm:$0xff]
        %v211 = vld [vmem:[%s209 + $0x8] sm:$0xff]
        %s212 = scalar_lea.vmem %s171, 96 [#allocation2]
        %v213 = vld [vmem:[%s212] sm:$0xff]
        %v214 = vld [vmem:[%s212 + $0x8] sm:$0xff]
        %s215 = scalar_lea.vmem %s171, 48 [#allocation2]
        %v216 = vld [vmem:[%s215] sm:$0xff]
        %v217 = vld [vmem:[%s215 + $0x8] sm:$0xff]
        %s218 = scalar_lea.vmem %s171, 112 [#allocation2]
        %v219 = vld [vmem:[%s218] sm:$0xff]
        %v220 = vld [vmem:[%s218 + $0x8] sm:$0xff]
        %225 = vrot.lane.b32.xlu0 %v204, 16
        %v226 = vpop.permute.xlu0 %225
        %227 = vrot.lane.b32.xlu0 %v205, 16
        %v228 = vpop.permute.xlu0 %227
        %229 = vrot.lane.b32.xlu0 %v207, 16
        %v230 = vpop.permute.xlu0 %229
        %231 = vrot.lane.b32.xlu0 %v208, 16
        %v232 = vpop.permute.xlu0 %231
        %241 = vrot.lane.b32.xlu0 %v210, 32
        %v242 = vpop.permute.xlu0 %241
        %243 = vrot.lane.b32.xlu0 %v211, 32
        %v244 = vpop.permute.xlu0 %243
        %245 = vrot.lane.b32.xlu0 %v213, 32
        %v246 = vpop.permute.xlu0 %245
        %247 = vrot.lane.b32.xlu0 %v214, 32
        %v248 = vpop.permute.xlu0 %247
        %257 = vrot.lane.b32.xlu0 %v216, 48
        %v258 = vpop.permute.xlu0 %257
        %259 = vrot.lane.b32.xlu0 %v217, 48
        %v260 = vpop.permute.xlu0 %259
        %261 = vrot.lane.b32.xlu0 %v219, 48
        %v262 = vpop.permute.xlu0 %261
        %263 = vrot.lane.b32.xlu0 %v220, 48
        %v264 = vpop.permute.xlu0 %263
        %vm269 = vcmask 130048
        %v270 = vsel %vm269, %v198, %v226
        %v271 = vsel %vm269, %v199, %v228
        %v272 = vsel %vm269, %v201, %v230
        %v273 = vsel %vm269, %v202, %v232
        %vm274 = vcmask 261120
        %v275 = vsel %vm274, %v270, %v242
        %v276 = vsel %vm274, %v271, %v244
        %v277 = vsel %vm274, %v272, %v246
        %v278 = vsel %vm274, %v273, %v248
        %vm279 = vcmask 392192
        %v280 = vsel %vm279, %v275, %v258
        %v281 = vsel %vm279, %v276, %v260
        %v282 = vsel %vm279, %v277, %v262
        %v283 = vsel %vm279, %v278, %v264
        %v284 = vld [vmem:[#allocation5] sm:$0xff]
        %v285 = vld [vmem:[#allocation5 + $0x8] sm:$0xff]
        %v286 = vld [vmem:[#allocation5 + $0x10] sm:$0xff]
        %v287 = vld [vmem:[#allocation5 + $0x18] sm:$0xff]
        %v288 = vld [vmem:[#allocation5 + $0x20] sm:$0xff]
        %v289 = vld [vmem:[#allocation5 + $0x28] sm:$0xff]
        %v290 = vld [vmem:[#allocation5 + $0x30] sm:$0xff]
        %v291 = vld [vmem:[#allocation5 + $0x38] sm:$0xff]
        %vm292 = vcmask 523264
        %v294 = vsel %vm292, %v280, 0
        %v297 = vsel %vm292, %v281, 0
        %v300 = vsel %vm292, %v282, 0
        %v303 = vsel %vm292, %v283, 0
        %305 = vmatprep.subr.mxu0 0.0
        %v306 = vand.u32 %v284, 4294901760
        %307 = vmatpush1.msra.mxu0 %v306
        %308 = vmatprep.subr.mxu0 0.0
        %v309 = vand.u32 %v285, 4294901760
        %310 = vmatpush1.msra.mxu0 %v309
        %311 = vmatprep.subr.mxu0 0.0
        %v312 = vand.u32 %v286, 4294901760
        %313 = vmatpush1.msra.mxu0 %v312
        %314 = vmatprep.subr.mxu0 0.0
        %v315 = vand.u32 %v287, 4294901760
        %316 = vmatpush1.msra.mxu0 %v315
        %317 = vmatprep.subr.mxu0 0.0
        %v318 = vand.u32 %v288, 4294901760
        %319 = vmatpush1.msra.mxu0 %v318
        %320 = vmatprep.subr.mxu0 0.0
        %v321 = vand.u32 %v289, 4294901760
        %322 = vmatpush1.msra.mxu0 %v321
        %323 = vmatprep.subr.mxu0 0.0
        %v324 = vand.u32 %v290, 4294901760
        %325 = vmatpush1.msra.mxu0 %v324
        %326 = vmatprep.subr.mxu0 0.0
        %v327 = vand.u32 %v291, 4294901760
        %328 = vmatpush1.msra.mxu0 %v327
        %329 = vmatprep.subr.mxu0 0.0
        %330 = vmatpush1.msra.mxu0 0.0
        %331 = vmatprep.subr.mxu0 0.0
        %332 = vmatpush1.msra.mxu0 0.0
        %333 = vmatprep.subr.mxu0 0.0
        %334 = vmatpush1.msra.mxu0 0.0
        %335 = vmatprep.subr.mxu0 0.0
        %336 = vmatpush1.msra.mxu0 0.0
        %337 = vmatprep.subr.mxu0 0.0
        %338 = vmatpush1.msra.mxu0 0.0
        %339 = vmatprep.subr.mxu0 0.0
        %340 = vmatpush1.msra.mxu0 0.0
        %341 = vmatprep.subr.mxu0 0.0
        %342 = vmatpush1.msra.mxu0 0.0
        %343 = vmatprep.subr.mxu0 0.0
        %344 = vmatpush1.msra.mxu0 0.0
        %345 = vmatprep.subr.mxu0 0.0
        %346 = vmatpush1.msra.mxu0 0.0
        %347 = vmatprep.subr.mxu0 0.0
        %348 = vmatpush1.msra.mxu0 0.0
        %349 = vmatprep.subr.mxu0 0.0
        %350 = vmatpush1.msra.mxu0 0.0
        %351 = vmatprep.subr.mxu0 0.0
        %352 = vmatpush1.msra.mxu0 0.0
        %353 = vmatprep.subr.mxu0 0.0
        %354 = vmatpush1.msra.mxu0 0.0
        %355 = vmatprep.subr.mxu0 0.0
        %356 = vmatpush1.msra.mxu0 0.0
        %357 = vmatprep.subr.mxu0 0.0
        %358 = vmatpush1.msra.mxu0 0.0
        %359 = vmatprep.subr.mxu0 0.0
        %360 = vmatpush1.msra.mxu0 0.0
        %361 = vmatprep.subr.mxu0 0.0
        %362 = vmatpush1.msra.mxu0 0.0
        %363 = vmatprep.subr.mxu0 0.0
        %364 = vmatpush1.msra.mxu0 0.0
        %365 = vmatprep.subr.mxu0 0.0
        %366 = vmatpush1.msra.mxu0 0.0
        %367 = vmatprep.subr.mxu0 0.0
        %368 = vmatpush1.msra.mxu0 0.0
        %369 = vmatprep.subr.mxu0 0.0
        %370 = vmatpush1.msra.mxu0 0.0
        %371 = vmatprep.subr.mxu0 0.0
        %372 = vmatpush1.msra.mxu0 0.0
        %373 = vmatprep.subr.mxu0 0.0
        %374 = vmatpush1.msra.mxu0 0.0
        %375 = vmatprep.subr.mxu0 0.0
        %376 = vmatpush1.msra.mxu0 0.0
        %377 = vmatprep.mubr.f32.mxu0 0.0
        %v378 = vand.u32 %v294, 4294901760
        %v379 = vsub.f32 %v294, %v378
        %v380 = vand.u32 %v379, 4294901760
        %v381 = vsub.f32 %v379, %v380
        %v382 = vand.u32 %v381, 4294901760
        %383 = vmatmul.mubr.f32.gmra.mrb[0].mxu0 %v382
        %v384 = vpop.f32.mrb[0].mxu0
        %v385 = vadd.f32 0.0, %v384
        %v386 = vpop.f32.mrb[0].mxu0
        %387 = vmatprep.mubr.f32.mxu0 0.0
        %v388 = vand.u32 %v297, 4294901760
        %v389 = vsub.f32 %v297, %v388
        %v390 = vand.u32 %v389, 4294901760
        %v391 = vsub.f32 %v389, %v390
        %v392 = vand.u32 %v391, 4294901760
        %393 = vmatmul.mubr.f32.gmra.mrb[0].mxu0 %v392
        %v394 = vpop.f32.mrb[0].mxu0
        %v395 = vadd.f32 0.0, %v394
        %v396 = vpop.f32.mrb[0].mxu0
        %397 = vmatprep.mubr.f32.mxu0 0.0
        %v398 = vand.u32 %v300, 4294901760
        %v399 = vsub.f32 %v300, %v398
        %v400 = vand.u32 %v399, 4294901760
        %v401 = vsub.f32 %v399, %v400
        %v402 = vand.u32 %v401, 4294901760
        %403 = vmatmul.mubr.f32.gmra.mrb[0].mxu0 %v402
        %v404 = vpop.f32.mrb[0].mxu0
        %v405 = vadd.f32 0.0, %v404
        %v406 = vpop.f32.mrb[0].mxu0
        %407 = vmatprep.mubr.f32.mxu0 0.0
        %v408 = vand.u32 %v303, 4294901760
        %v409 = vsub.f32 %v303, %v408
        %v410 = vand.u32 %v409, 4294901760
        %v411 = vsub.f32 %v409, %v410
        %v412 = vand.u32 %v411, 4294901760
        %413 = vmatmul.mubr.f32.gmra.mrb[0].mxu0 %v412
        %v414 = vpop.f32.mrb[0].mxu0
        %v415 = vadd.f32 0.0, %v414
        %v416 = vpop.f32.mrb[0].mxu0
        %417 = vdwg.mxu0
        %418 = vmatprep.subr.mxu0 0.0
        %v419 = vand.u32 %v284, 4294901760
        %v420 = vsub.f32 %v284, %v419
        %v421 = vand.u32 %v420, 4294901760
        %v422 = vsub.f32 %v420, %v421
        %v423 = vand.u32 %v422, 4294901760
        %424 = vmatpush1.msra.mxu0 %v423
        %425 = vmatprep.subr.mxu0 0.0
        %v426 = vand.u32 %v285, 4294901760
        %v427 = vsub.f32 %v285, %v426
        %v428 = vand.u32 %v427, 4294901760
        %v429 = vsub.f32 %v427, %v428
        %v430 = vand.u32 %v429, 4294901760
        %431 = vmatpush1.msra.mxu0 %v430
        %432 = vmatprep.subr.mxu0 0.0
        %v433 = vand.u32 %v286, 4294901760
        %v434 = vsub.f32 %v286, %v433
        %v435 = vand.u32 %v434, 4294901760
        %v436 = vsub.f32 %v434, %v435
        %v437 = vand.u32 %v436, 4294901760
        %438 = vmatpush1.msra.mxu0 %v437
        %439 = vmatprep.subr.mxu0 0.0
        %v440 = vand.u32 %v287, 4294901760
        %v441 = vsub.f32 %v287, %v440
        %v442 = vand.u32 %v441, 4294901760
        %v443 = vsub.f32 %v441, %v442
        %v444 = vand.u32 %v443, 4294901760
        %445 = vmatpush1.msra.mxu0 %v444
        %446 = vmatprep.subr.mxu0 0.0
        %v447 = vand.u32 %v288, 4294901760
        %v448 = vsub.f32 %v288, %v447
        %v449 = vand.u32 %v448, 4294901760
        %v450 = vsub.f32 %v448, %v449
        %v451 = vand.u32 %v450, 4294901760
        %452 = vmatpush1.msra.mxu0 %v451
        %453 = vmatprep.subr.mxu0 0.0
        %v454 = vand.u32 %v289, 4294901760
        %v455 = vsub.f32 %v289, %v454
        %v456 = vand.u32 %v455, 4294901760
        %v457 = vsub.f32 %v455, %v456
        %v458 = vand.u32 %v457, 4294901760
        %459 = vmatpush1.msra.mxu0 %v458
        %460 = vmatprep.subr.mxu0 0.0
        %v461 = vand.u32 %v290, 4294901760
        %v462 = vsub.f32 %v290, %v461
        %v463 = vand.u32 %v462, 4294901760
        %v464 = vsub.f32 %v462, %v463
        %v465 = vand.u32 %v464, 4294901760
        %466 = vmatpush1.msra.mxu0 %v465
        %467 = vmatprep.subr.mxu0 0.0
        %v468 = vand.u32 %v291, 4294901760
        %v469 = vsub.f32 %v291, %v468
        %v470 = vand.u32 %v469, 4294901760
        %v471 = vsub.f32 %v469, %v470
        %v472 = vand.u32 %v471, 4294901760
        %473 = vmatpush1.msra.mxu0 %v472
        %474 = vmatprep.subr.mxu0 0.0
        %475 = vmatpush1.msra.mxu0 0.0
        %476 = vmatprep.subr.mxu0 0.0
        %477 = vmatpush1.msra.mxu0 0.0
        %478 = vmatprep.subr.mxu0 0.0
        %479 = vmatpush1.msra.mxu0 0.0
        %480 = vmatprep.subr.mxu0 0.0
        %481 = vmatpush1.msra.mxu0 0.0
        %482 = vmatprep.subr.mxu0 0.0
        %483 = vmatpush1.msra.mxu0 0.0
        %484 = vmatprep.subr.mxu0 0.0
        %485 = vmatpush1.msra.mxu0 0.0
        %486 = vmatprep.subr.mxu0 0.0
        %487 = vmatpush1.msra.mxu0 0.0
        %488 = vmatprep.subr.mxu0 0.0
        %489 = vmatpush1.msra.mxu0 0.0
        %490 = vmatprep.subr.mxu0 0.0
        %491 = vmatpush1.msra.mxu0 0.0
        %492 = vmatprep.subr.mxu0 0.0
        %493 = vmatpush1.msra.mxu0 0.0
        %494 = vmatprep.subr.mxu0 0.0
        %495 = vmatpush1.msra.mxu0 0.0
        %496 = vmatprep.subr.mxu0 0.0
        %497 = vmatpush1.msra.mxu0 0.0
        %498 = vmatprep.subr.mxu0 0.0
        %499 = vmatpush1.msra.mxu0 0.0
        %500 = vmatprep.subr.mxu0 0.0
        %501 = vmatpush1.msra.mxu0 0.0
        %502 = vmatprep.subr.mxu0 0.0
        %503 = vmatpush1.msra.mxu0 0.0
        %504 = vmatprep.subr.mxu0 0.0
        %505 = vmatpush1.msra.mxu0 0.0
        %506 = vmatprep.subr.mxu0 0.0
        %507 = vmatpush1.msra.mxu0 0.0
        %508 = vmatprep.subr.mxu0 0.0
        %509 = vmatpush1.msra.mxu0 0.0
        %510 = vmatprep.subr.mxu0 0.0
        %511 = vmatpush1.msra.mxu0 0.0
        %512 = vmatprep.subr.mxu0 0.0
        %513 = vmatpush1.msra.mxu0 0.0
        %514 = vmatprep.subr.mxu0 0.0
        %515 = vmatpush1.msra.mxu0 0.0
        %516 = vmatprep.subr.mxu0 0.0
        %517 = vmatpush1.msra.mxu0 0.0
        %518 = vmatprep.subr.mxu0 0.0
        %519 = vmatpush1.msra.mxu0 0.0
        %520 = vmatprep.subr.mxu0 0.0
        %521 = vmatpush1.msra.mxu0 0.0
        %522 = vmatprep.mubr.f32.mxu0 0.0
        %v523 = vand.u32 %v294, 4294901760
        %524 = vmatmul.mubr.f32.gmra.mrb[0].mxu0 %v523
        %v525 = vpop.f32.mrb[0].mxu0
        %v526 = vadd.f32 %v385, %v525
        %v527 = vpop.f32.mrb[0].mxu0
        %528 = vmatprep.mubr.f32.mxu0 0.0
        %v529 = vand.u32 %v297, 4294901760
        %530 = vmatmul.mubr.f32.gmra.mrb[0].mxu0 %v529
        %v531 = vpop.f32.mrb[0].mxu0
        %v532 = vadd.f32 %v395, %v531
        %v533 = vpop.f32.mrb[0].mxu0
        %534 = vmatprep.mubr.f32.mxu0 0.0
        %v535 = vand.u32 %v300, 4294901760
        %536 = vmatmul.mubr.f32.gmra.mrb[0].mxu0 %v535
        %v537 = vpop.f32.mrb[0].mxu0
        %v538 = vadd.f32 %v405, %v537
        %v539 = vpop.f32.mrb[0].mxu0
        %540 = vmatprep.mubr.f32.mxu0 0.0
        %v541 = vand.u32 %v303, 4294901760
        %542 = vmatmul.mubr.f32.gmra.mrb[0].mxu0 %v541
        %v543 = vpop.f32.mrb[0].mxu0
        %v544 = vadd.f32 %v415, %v543
        %v545 = vpop.f32.mrb[0].mxu0
        %546 = vdwg.mxu0
        %547 = vmatprep.subr.mxu0 0.0
        %v548 = vand.u32 %v284, 4294901760
        %v549 = vsub.f32 %v284, %v548
        %550 = vmatpush1.msra.mxu0 %v549
        %551 = vmatprep.subr.mxu0 0.0
        %v552 = vand.u32 %v285, 4294901760
        %v553 = vsub.f32 %v285, %v552
        %554 = vmatpush1.msra.mxu0 %v553
        %555 = vmatprep.subr.mxu0 0.0
        %v556 = vand.u32 %v286, 4294901760
        %v557 = vsub.f32 %v286, %v556
        %558 = vmatpush1.msra.mxu0 %v557
        %559 = vmatprep.subr.mxu0 0.0
        %v560 = vand.u32 %v287, 4294901760
        %v561 = vsub.f32 %v287, %v560
        %562 = vmatpush1.msra.mxu0 %v561
        %563 = vmatprep.subr.mxu0 0.0
        %v564 = vand.u32 %v288, 4294901760
        %v565 = vsub.f32 %v288, %v564
        %566 = vmatpush1.msra.mxu0 %v565
        %567 = vmatprep.subr.mxu0 0.0
        %v568 = vand.u32 %v289, 4294901760
        %v569 = vsub.f32 %v289, %v568
        %570 = vmatpush1.msra.mxu0 %v569
        %571 = vmatprep.subr.mxu0 0.0
        %v572 = vand.u32 %v290, 4294901760
        %v573 = vsub.f32 %v290, %v572
        %574 = vmatpush1.msra.mxu0 %v573
        %575 = vmatprep.subr.mxu0 0.0
        %v576 = vand.u32 %v291, 4294901760
        %v577 = vsub.f32 %v291, %v576
        %578 = vmatpush1.msra.mxu0 %v577
        %579 = vmatprep.subr.mxu0 0.0
        %580 = vmatpush1.msra.mxu0 0.0
        %581 = vmatprep.subr.mxu0 0.0
        %582 = vmatpush1.msra.mxu0 0.0
        %583 = vmatprep.subr.mxu0 0.0
        %584 = vmatpush1.msra.mxu0 0.0
        %585 = vmatprep.subr.mxu0 0.0
        %586 = vmatpush1.msra.mxu0 0.0
        %587 = vmatprep.subr.mxu0 0.0
        %588 = vmatpush1.msra.mxu0 0.0
        %589 = vmatprep.subr.mxu0 0.0
        %590 = vmatpush1.msra.mxu0 0.0
        %591 = vmatprep.subr.mxu0 0.0
        %592 = vmatpush1.msra.mxu0 0.0
        %593 = vmatprep.subr.mxu0 0.0
        %594 = vmatpush1.msra.mxu0 0.0
        %595 = vmatprep.subr.mxu0 0.0
        %596 = vmatpush1.msra.mxu0 0.0
        %597 = vmatprep.subr.mxu0 0.0
        %598 = vmatpush1.msra.mxu0 0.0
        %599 = vmatprep.subr.mxu0 0.0
        %600 = vmatpush1.msra.mxu0 0.0
        %601 = vmatprep.subr.mxu0 0.0
        %602 = vmatpush1.msra.mxu0 0.0
        %603 = vmatprep.subr.mxu0 0.0
        %604 = vmatpush1.msra.mxu0 0.0
        %605 = vmatprep.subr.mxu0 0.0
        %606 = vmatpush1.msra.mxu0 0.0
        %607 = vmatprep.subr.mxu0 0.0
        %608 = vmatpush1.msra.mxu0 0.0
        %609 = vmatprep.subr.mxu0 0.0
        %610 = vmatpush1.msra.mxu0 0.0
        %611 = vmatprep.subr.mxu0 0.0
        %612 = vmatpush1.msra.mxu0 0.0
        %613 = vmatprep.subr.mxu0 0.0
        %614 = vmatpush1.msra.mxu0 0.0
        %615 = vmatprep.subr.mxu0 0.0
        %616 = vmatpush1.msra.mxu0 0.0
        %617 = vmatprep.subr.mxu0 0.0
        %618 = vmatpush1.msra.mxu0 0.0
        %619 = vmatprep.subr.mxu0 0.0
        %620 = vmatpush1.msra.mxu0 0.0
        %621 = vmatprep.subr.mxu0 0.0
        %622 = vmatpush1.msra.mxu0 0.0
        %623 = vmatprep.subr.mxu0 0.0
        %624 = vmatpush1.msra.mxu0 0.0
        %625 = vmatprep.subr.mxu0 0.0
        %626 = vmatpush1.msra.mxu0 0.0
        %627 = vmatprep.mubr.f32.mxu0 0.0
        %v628 = vand.u32 %v294, 4294901760
        %v629 = vsub.f32 %v294, %v628
        %630 = vmatmul.mubr.f32.gmra.mrb[0].mxu0 %v629
        %v631 = vpop.f32.mrb[0].mxu0
        %v632 = vadd.f32 %v526, %v631
        %v633 = vpop.f32.mrb[0].mxu0
        %634 = vmatprep.mubr.f32.mxu0 0.0
        %v635 = vand.u32 %v297, 4294901760
        %v636 = vsub.f32 %v297, %v635
        %637 = vmatmul.mubr.f32.gmra.mrb[0].mxu0 %v636
        %v638 = vpop.f32.mrb[0].mxu0
        %v639 = vadd.f32 %v532, %v638
        %v640 = vpop.f32.mrb[0].mxu0
        %641 = vmatprep.mubr.f32.mxu0 0.0
        %v642 = vand.u32 %v300, 4294901760
        %v643 = vsub.f32 %v300, %v642
        %644 = vmatmul.mubr.f32.gmra.mrb[0].mxu0 %v643
        %v645 = vpop.f32.mrb[0].mxu0
        %v646 = vadd.f32 %v538, %v645
        %v647 = vpop.f32.mrb[0].mxu0
        %648 = vmatprep.mubr.f32.mxu0 0.0
        %v649 = vand.u32 %v303, 4294901760
        %v650 = vsub.f32 %v303, %v649
        %651 = vmatmul.mubr.f32.gmra.mrb[0].mxu0 %v650
        %v652 = vpop.f32.mrb[0].mxu0
        %v653 = vadd.f32 %v544, %v652
        %v654 = vpop.f32.mrb[0].mxu0
        %655 = vdwg.mxu0
        %656 = vmatprep.subr.mxu0 0.0
        %v657 = vand.u32 %v284, 4294901760
        %658 = vmatpush1.msra.mxu0 %v657
        %659 = vmatprep.subr.mxu0 0.0
        %v660 = vand.u32 %v285, 4294901760
        %661 = vmatpush1.msra.mxu0 %v660
        %662 = vmatprep.subr.mxu0 0.0
        %v663 = vand.u32 %v286, 4294901760
        %664 = vmatpush1.msra.mxu0 %v663
        %665 = vmatprep.subr.mxu0 0.0
        %v666 = vand.u32 %v287, 4294901760
        %667 = vmatpush1.msra.mxu0 %v666
        %668 = vmatprep.subr.mxu0 0.0
        %v669 = vand.u32 %v288, 4294901760
        %670 = vmatpush1.msra.mxu0 %v669
        %671 = vmatprep.subr.mxu0 0.0
        %v672 = vand.u32 %v289, 4294901760
        %673 = vmatpush1.msra.mxu0 %v672
        %674 = vmatprep.subr.mxu0 0.0
        %v675 = vand.u32 %v290, 4294901760
        %676 = vmatpush1.msra.mxu0 %v675
        %677 = vmatprep.subr.mxu0 0.0
        %v678 = vand.u32 %v291, 4294901760
        %679 = vmatpush1.msra.mxu0 %v678
        %680 = vmatprep.subr.mxu0 0.0
        %681 = vmatpush1.msra.mxu0 0.0
        %682 = vmatprep.subr.mxu0 0.0
        %683 = vmatpush1.msra.mxu0 0.0
        %684 = vmatprep.subr.mxu0 0.0
        %685 = vmatpush1.msra.mxu0 0.0
        %686 = vmatprep.subr.mxu0 0.0
        %687 = vmatpush1.msra.mxu0 0.0
        %688 = vmatprep.subr.mxu0 0.0
        %689 = vmatpush1.msra.mxu0 0.0
        %690 = vmatprep.subr.mxu0 0.0
        %691 = vmatpush1.msra.mxu0 0.0
        %692 = vmatprep.subr.mxu0 0.0
        %693 = vmatpush1.msra.mxu0 0.0
        %694 = vmatprep.subr.mxu0 0.0
        %695 = vmatpush1.msra.mxu0 0.0
        %696 = vmatprep.subr.mxu0 0.0
        %697 = vmatpush1.msra.mxu0 0.0
        %698 = vmatprep.subr.mxu0 0.0
        %699 = vmatpush1.msra.mxu0 0.0
        %700 = vmatprep.subr.mxu0 0.0
        %701 = vmatpush1.msra.mxu0 0.0
        %702 = vmatprep.subr.mxu0 0.0
        %703 = vmatpush1.msra.mxu0 0.0
        %704 = vmatprep.subr.mxu0 0.0
        %705 = vmatpush1.msra.mxu0 0.0
        %706 = vmatprep.subr.mxu0 0.0
        %707 = vmatpush1.msra.mxu0 0.0
        %708 = vmatprep.subr.mxu0 0.0
        %709 = vmatpush1.msra.mxu0 0.0
        %710 = vmatprep.subr.mxu0 0.0
        %711 = vmatpush1.msra.mxu0 0.0
        %712 = vmatprep.subr.mxu0 0.0
        %713 = vmatpush1.msra.mxu0 0.0
        %714 = vmatprep.subr.mxu0 0.0
        %715 = vmatpush1.msra.mxu0 0.0
        %716 = vmatprep.subr.mxu0 0.0
        %717 = vmatpush1.msra.mxu0 0.0
        %718 = vmatprep.subr.mxu0 0.0
        %719 = vmatpush1.msra.mxu0 0.0
        %720 = vmatprep.subr.mxu0 0.0
        %721 = vmatpush1.msra.mxu0 0.0
        %722 = vmatprep.subr.mxu0 0.0
        %723 = vmatpush1.msra.mxu0 0.0
        %724 = vmatprep.subr.mxu0 0.0
        %725 = vmatpush1.msra.mxu0 0.0
        %726 = vmatprep.subr.mxu0 0.0
        %727 = vmatpush1.msra.mxu0 0.0
        %728 = vmatprep.mubr.f32.mxu0 0.0
        %v729 = vand.u32 %v294, 4294901760
        %v730 = vsub.f32 %v294, %v729
        %v731 = vand.u32 %v730, 4294901760
        %732 = vmatmul.mubr.f32.gmra.mrb[0].mxu0 %v731
        %v733 = vpop.f32.mrb[0].mxu0
        %v734 = vadd.f32 %v632, %v733
        %v735 = vpop.f32.mrb[0].mxu0
        %736 = vmatprep.mubr.f32.mxu0 0.0
        %v737 = vand.u32 %v297, 4294901760
        %v738 = vsub.f32 %v297, %v737
        %v739 = vand.u32 %v738, 4294901760
        %740 = vmatmul.mubr.f32.gmra.mrb[0].mxu0 %v739
        %v741 = vpop.f32.mrb[0].mxu0
        %v742 = vadd.f32 %v639, %v741
        %v743 = vpop.f32.mrb[0].mxu0
        %744 = vmatprep.mubr.f32.mxu0 0.0
        %v745 = vand.u32 %v300, 4294901760
        %v746 = vsub.f32 %v300, %v745
        %v747 = vand.u32 %v746, 4294901760
        %748 = vmatmul.mubr.f32.gmra.mrb[0].mxu0 %v747
        %v749 = vpop.f32.mrb[0].mxu0
        %v750 = vadd.f32 %v646, %v749
        %v751 = vpop.f32.mrb[0].mxu0
        %752 = vmatprep.mubr.f32.mxu0 0.0
        %v753 = vand.u32 %v303, 4294901760
        %v754 = vsub.f32 %v303, %v753
        %v755 = vand.u32 %v754, 4294901760
        %756 = vmatmul.mubr.f32.gmra.mrb[0].mxu0 %v755
        %v757 = vpop.f32.mrb[0].mxu0
        %v758 = vadd.f32 %v653, %v757
        %v759 = vpop.f32.mrb[0].mxu0
        %760 = vdwg.mxu0
        %761 = vmatprep.subr.mxu0 0.0
        %v762 = vand.u32 %v284, 4294901760
        %v763 = vsub.f32 %v284, %v762
        %v764 = vand.u32 %v763, 4294901760
        %765 = vmatpush1.msra.mxu0 %v764
        %766 = vmatprep.subr.mxu0 0.0
        %v767 = vand.u32 %v285, 4294901760
        %v768 = vsub.f32 %v285, %v767
        %v769 = vand.u32 %v768, 4294901760
        %770 = vmatpush1.msra.mxu0 %v769
        %771 = vmatprep.subr.mxu0 0.0
        %v772 = vand.u32 %v286, 4294901760
        %v773 = vsub.f32 %v286, %v772
        %v774 = vand.u32 %v773, 4294901760
        %775 = vmatpush1.msra.mxu0 %v774
        %776 = vmatprep.subr.mxu0 0.0
        %v777 = vand.u32 %v287, 4294901760
        %v778 = vsub.f32 %v287, %v777
        %v779 = vand.u32 %v778, 4294901760
        %780 = vmatpush1.msra.mxu0 %v779
        %781 = vmatprep.subr.mxu0 0.0
        %v782 = vand.u32 %v288, 4294901760
        %v783 = vsub.f32 %v288, %v782
        %v784 = vand.u32 %v783, 4294901760
        %785 = vmatpush1.msra.mxu0 %v784
        %786 = vmatprep.subr.mxu0 0.0
        %v787 = vand.u32 %v289, 4294901760
        %v788 = vsub.f32 %v289, %v787
        %v789 = vand.u32 %v788, 4294901760
        %790 = vmatpush1.msra.mxu0 %v789
        %791 = vmatprep.subr.mxu0 0.0
        %v792 = vand.u32 %v290, 4294901760
        %v793 = vsub.f32 %v290, %v792
        %v794 = vand.u32 %v793, 4294901760
        %795 = vmatpush1.msra.mxu0 %v794
        %796 = vmatprep.subr.mxu0 0.0
        %v797 = vand.u32 %v291, 4294901760
        %v798 = vsub.f32 %v291, %v797
        %v799 = vand.u32 %v798, 4294901760
        %800 = vmatpush1.msra.mxu0 %v799
        %801 = vmatprep.subr.mxu0 0.0
        %802 = vmatpush1.msra.mxu0 0.0
        %803 = vmatprep.subr.mxu0 0.0
        %804 = vmatpush1.msra.mxu0 0.0
        %805 = vmatprep.subr.mxu0 0.0
        %806 = vmatpush1.msra.mxu0 0.0
        %807 = vmatprep.subr.mxu0 0.0
        %808 = vmatpush1.msra.mxu0 0.0
        %809 = vmatprep.subr.mxu0 0.0
        %810 = vmatpush1.msra.mxu0 0.0
        %811 = vmatprep.subr.mxu0 0.0
        %812 = vmatpush1.msra.mxu0 0.0
        %813 = vmatprep.subr.mxu0 0.0
        %814 = vmatpush1.msra.mxu0 0.0
        %815 = vmatprep.subr.mxu0 0.0
        %816 = vmatpush1.msra.mxu0 0.0
        %817 = vmatprep.subr.mxu0 0.0
        %818 = vmatpush1.msra.mxu0 0.0
        %819 = vmatprep.subr.mxu0 0.0
        %820 = vmatpush1.msra.mxu0 0.0
        %821 = vmatprep.subr.mxu0 0.0
        %822 = vmatpush1.msra.mxu0 0.0
        %823 = vmatprep.subr.mxu0 0.0
        %824 = vmatpush1.msra.mxu0 0.0
        %825 = vmatprep.subr.mxu0 0.0
        %826 = vmatpush1.msra.mxu0 0.0
        %827 = vmatprep.subr.mxu0 0.0
        %828 = vmatpush1.msra.mxu0 0.0
        %829 = vmatprep.subr.mxu0 0.0
        %830 = vmatpush1.msra.mxu0 0.0
        %831 = vmatprep.subr.mxu0 0.0
        %832 = vmatpush1.msra.mxu0 0.0
        %833 = vmatprep.subr.mxu0 0.0
        %834 = vmatpush1.msra.mxu0 0.0
        %835 = vmatprep.subr.mxu0 0.0
        %836 = vmatpush1.msra.mxu0 0.0
        %837 = vmatprep.subr.mxu0 0.0
        %838 = vmatpush1.msra.mxu0 0.0
        %839 = vmatprep.subr.mxu0 0.0
        %840 = vmatpush1.msra.mxu0 0.0
        %841 = vmatprep.subr.mxu0 0.0
        %842 = vmatpush1.msra.mxu0 0.0
        %843 = vmatprep.subr.mxu0 0.0
        %844 = vmatpush1.msra.mxu0 0.0
        %845 = vmatprep.subr.mxu0 0.0
        %846 = vmatpush1.msra.mxu0 0.0
        %847 = vmatprep.subr.mxu0 0.0
        %848 = vmatpush1.msra.mxu0 0.0
        %849 = vmatprep.mubr.f32.mxu0 0.0
        %v850 = vand.u32 %v294, 4294901760
        %851 = vmatmul.mubr.f32.gmra.mrb[0].mxu0 %v850
        %v852 = vpop.f32.mrb[0].mxu0
        %v853 = vadd.f32 %v734, %v852
        %v854 = vpop.f32.mrb[0].mxu0
        %855 = vmatprep.mubr.f32.mxu0 0.0
        %v856 = vand.u32 %v297, 4294901760
        %857 = vmatmul.mubr.f32.gmra.mrb[0].mxu0 %v856
        %v858 = vpop.f32.mrb[0].mxu0
        %v859 = vadd.f32 %v742, %v858
        %v860 = vpop.f32.mrb[0].mxu0
        %861 = vmatprep.mubr.f32.mxu0 0.0
        %v862 = vand.u32 %v300, 4294901760
        %863 = vmatmul.mubr.f32.gmra.mrb[0].mxu0 %v862
        %v864 = vpop.f32.mrb[0].mxu0
        %v865 = vadd.f32 %v750, %v864
        %v866 = vpop.f32.mrb[0].mxu0
        %867 = vmatprep.mubr.f32.mxu0 0.0
        %v868 = vand.u32 %v303, 4294901760
        %869 = vmatmul.mubr.f32.gmra.mrb[0].mxu0 %v868
        %v870 = vpop.f32.mrb[0].mxu0
        %v871 = vadd.f32 %v758, %v870
        %v872 = vpop.f32.mrb[0].mxu0
        %873 = vdwg.mxu0
        %874 = vmatprep.subr.mxu0 0.0
        %v875 = vand.u32 %v284, 4294901760
        %876 = vmatpush1.msra.mxu0 %v875
        %877 = vmatprep.subr.mxu0 0.0
        %v878 = vand.u32 %v285, 4294901760
        %879 = vmatpush1.msra.mxu0 %v878
        %880 = vmatprep.subr.mxu0 0.0
        %v881 = vand.u32 %v286, 4294901760
        %882 = vmatpush1.msra.mxu0 %v881
        %883 = vmatprep.subr.mxu0 0.0
        %v884 = vand.u32 %v287, 4294901760
        %885 = vmatpush1.msra.mxu0 %v884
        %886 = vmatprep.subr.mxu0 0.0
        %v887 = vand.u32 %v288, 4294901760
        %888 = vmatpush1.msra.mxu0 %v887
        %889 = vmatprep.subr.mxu0 0.0
        %v890 = vand.u32 %v289, 4294901760
        %891 = vmatpush1.msra.mxu0 %v890
        %892 = vmatprep.subr.mxu0 0.0
        %v893 = vand.u32 %v290, 4294901760
        %894 = vmatpush1.msra.mxu0 %v893
        %895 = vmatprep.subr.mxu0 0.0
        %v896 = vand.u32 %v291, 4294901760
        %897 = vmatpush1.msra.mxu0 %v896
        %898 = vmatprep.subr.mxu0 0.0
        %899 = vmatpush1.msra.mxu0 0.0
        %900 = vmatprep.subr.mxu0 0.0
        %901 = vmatpush1.msra.mxu0 0.0
        %902 = vmatprep.subr.mxu0 0.0
        %903 = vmatpush1.msra.mxu0 0.0
        %904 = vmatprep.subr.mxu0 0.0
        %905 = vmatpush1.msra.mxu0 0.0
        %906 = vmatprep.subr.mxu0 0.0
        %907 = vmatpush1.msra.mxu0 0.0
        %908 = vmatprep.subr.mxu0 0.0
        %909 = vmatpush1.msra.mxu0 0.0
        %910 = vmatprep.subr.mxu0 0.0
        %911 = vmatpush1.msra.mxu0 0.0
        %912 = vmatprep.subr.mxu0 0.0
        %913 = vmatpush1.msra.mxu0 0.0
        %914 = vmatprep.subr.mxu0 0.0
        %915 = vmatpush1.msra.mxu0 0.0
        %916 = vmatprep.subr.mxu0 0.0
        %917 = vmatpush1.msra.mxu0 0.0
        %918 = vmatprep.subr.mxu0 0.0
        %919 = vmatpush1.msra.mxu0 0.0
        %920 = vmatprep.subr.mxu0 0.0
        %921 = vmatpush1.msra.mxu0 0.0
        %922 = vmatprep.subr.mxu0 0.0
        %923 = vmatpush1.msra.mxu0 0.0
        %924 = vmatprep.subr.mxu0 0.0
        %925 = vmatpush1.msra.mxu0 0.0
        %926 = vmatprep.subr.mxu0 0.0
        %927 = vmatpush1.msra.mxu0 0.0
        %928 = vmatprep.subr.mxu0 0.0
        %929 = vmatpush1.msra.mxu0 0.0
        %930 = vmatprep.subr.mxu0 0.0
        %931 = vmatpush1.msra.mxu0 0.0
        %932 = vmatprep.subr.mxu0 0.0
        %933 = vmatpush1.msra.mxu0 0.0
        %934 = vmatprep.subr.mxu0 0.0
        %935 = vmatpush1.msra.mxu0 0.0
        %936 = vmatprep.subr.mxu0 0.0
        %937 = vmatpush1.msra.mxu0 0.0
        %938 = vmatprep.subr.mxu0 0.0
        %939 = vmatpush1.msra.mxu0 0.0
        %940 = vmatprep.subr.mxu0 0.0
        %941 = vmatpush1.msra.mxu0 0.0
        %942 = vmatprep.subr.mxu0 0.0
        %943 = vmatpush1.msra.mxu0 0.0
        %944 = vmatprep.subr.mxu0 0.0
        %945 = vmatpush1.msra.mxu0 0.0
        %946 = vmatprep.mubr.f32.mxu0 0.0
        %v947 = vand.u32 %v294, 4294901760
        %948 = vmatmul.mubr.f32.gmra.mrb[0].mxu0 %v947
        %v949 = vpop.f32.mrb[0].mxu0
        %v950 = vadd.f32 %v853, %v949
        %v951 = vpop.f32.mrb[0].mxu0
        %952 = vmatprep.mubr.f32.mxu0 0.0
        %v953 = vand.u32 %v297, 4294901760
        %954 = vmatmul.mubr.f32.gmra.mrb[0].mxu0 %v953
        %v955 = vpop.f32.mrb[0].mxu0
        %v956 = vadd.f32 %v859, %v955
        %v957 = vpop.f32.mrb[0].mxu0
        %958 = vmatprep.mubr.f32.mxu0 0.0
        %v959 = vand.u32 %v300, 4294901760
        %960 = vmatmul.mubr.f32.gmra.mrb[0].mxu0 %v959
        %v961 = vpop.f32.mrb[0].mxu0
        %v962 = vadd.f32 %v865, %v961
        %v963 = vpop.f32.mrb[0].mxu0
        %964 = vmatprep.mubr.f32.mxu0 0.0
        %v965 = vand.u32 %v303, 4294901760
        %966 = vmatmul.mubr.f32.gmra.mrb[0].mxu0 %v965
        %v967 = vpop.f32.mrb[0].mxu0
        %v968 = vadd.f32 %v871, %v967
        %v969 = vpop.f32.mrb[0].mxu0
        %970 = vdwg.mxu0
        %971 = vst.msk [vmem:[%s195] sm:$0xff] %vm292, %v950
        %972 = vst.msk [vmem:[%s195 + $0x8] sm:$0xff] %vm292, %v956
        %s973 = scalar_lea.vmem %s195, 16 [#allocation7]
        %974 = vst.msk [vmem:[%s973] sm:$0xff] %vm292, %v962
        %975 = vst.msk [vmem:[%s973 + $0x8] sm:$0xff] %vm292, %v968
        %s976 = sand.u32 %s91, 1
        %s977 = scalar_lea.sflag [#allocation4], %s976
        %s978 = sand.u32 %s91, 1
        %s979 = smul.addr %s978, 32
        %s980 = scalar_lea.vmem [#allocation7], %s979
        // Predicated region
        $region37: #{tpu_custom_call.1} parent=27 // pred_check
          %p981 = pneg %p101
        $region38: #{tpu_custom_call.1} parent=27 // pred_check_branch
          %983 = sbr.rel (%p981) target = $region40
        $region39: #{tpu_custom_call.1} parent=27 // pred_region
          %s984 = smul.u32 2, %s25
          %s986 = ssub.s32 512, 512
          %987 = vsyncadd %s977, %s986
          %s988 = smul.addr %s984, 2
          %s989 = smul.addr %s24, 4
          %s990 = sadd.s32 %s988, %s989
          %s991 = smul.addr %s990, 128
          %s992 = scalar_lea.hbm %s2, %s991
          %s993 = sshll.u32 %s980, 4
          %s994 = int_to_ptr.vmem [resolvable:$true] %s993
          %999 = dma.vmem_to_hbm [thread:$0]  %s994, 512, %s992, %s977, 128, 128, 8
        $region40: #{tpu_custom_call.1} parent=27 // pred_fallthru
          _
      $region28: #{tpu_custom_call.1} parent=5 // pred_fallthru
        _
      %p1000 = scmp.le.s32.totalorder 2, %s15
      // Predicated region
      $region41: #{tpu_custom_call.1} parent=5 // pred_check
        %p1001 = pneg %p1000
      $region42: #{tpu_custom_call.1} parent=5 // pred_check_branch
        %1003 = sbr.rel (%p1001) target = $region44
      $region43: #{tpu_custom_call.1} parent=5 // pred_region
        %s1004 = ssub.s32 %s15, 2
        // Predicated region
        $region45: #{tpu_custom_call.1} parent=43 // pred_check
          %p1005 = pneg %p107
        $region46: #{tpu_custom_call.1} parent=43 // pred_check_branch
          %1007 = sbr.rel (%p1005) target = $region48
        $region47: #{tpu_custom_call.1} parent=43 // pred_region
          %s1008 = sand.u32 %s92, 1
          %s1009 = scalar_lea.sflag [#allocation4], %s1008
          %s1010 = sand.u32 %s92, 1
          %s1011 = smul.addr %s1010, 32
          %s1012 = scalar_lea.vmem [#allocation7], %s1011
          %1013 = dma.done %s1009, 512
        $region48: #{tpu_custom_call.1} parent=43 // pred_fallthru
          _
      $region44: #{tpu_custom_call.1} parent=5 // pred_fallthru
        _
    $region6: #{tpu_custom_call.1} parent=1 // loop_footer
      %s19 = sadd.s32 1, %s15
    $region7: #{tpu_custom_call.1} parent=1 // loop_footer_branch
      %14 = sbr.rel target = $region3
    $region8: #{tpu_custom_call.1} parent=1 // loop_exit
      _
    %1014 = vsyncpa [#allocation3], 1
    %s1015 = scalar_lea.sflag [#allocation3], 1
    %1016 = vsyncpa %s1015, 1
    %1017 = vsyncpa [#allocation6], 1
    %1018 = vsyncpa [#allocation4], 1
    %s1019 = scalar_lea.sflag [#allocation4], 1
    %1020 = vsyncpa %s1019, 1

</llo_original>
